<compile_context>
chip_gen: v6e
topology: v6e:2x2x1
jax: 0.10.0
libtpu: 0.0.40
codegen_flags: <defaults>
</compile_context>

<pallas_src>
import jax
import jax.numpy as jnp
from jax.experimental import pallas as pl
from jax.experimental.pallas import tpu as pltpu

LEAKY_SLOPE = 0.01  # torch.nn.LeakyReLU default
BN_EPS = 1e-5       # torch.nn.BatchNorm1d default

_LANE = 128


def _round_up(v, m):
    return ((v + m - 1) // m) * m


def _vmem_capacity_bytes():
    """Physical VMEM of the attached TPU (fallback: 64 MiB, v7x-safe)."""
    try:
        return int(pltpu.get_tpu_info().vmem_capacity_bytes)
    except Exception:  # not on TPU / attribute mismatch -> conservative default
        return 64 * 1024 * 1024


def _working_set_bytes(n, fin_p, t, x_item, w_item, out_item):
    """Peak VMEM use for one grid step (Pallas double-buffers every input/output)."""
    x_bytes = 2 * n * fin_p * x_item       # resident x (still allocated with 2 buffers)
    w_bytes = 2 * fin_p * t * w_item       # streamed weight tile
    p_bytes = 2 * 8 * t * 4                # packed bias/gamma/beta tile (sublane-padded f32)
    o_bytes = 2 * n * t * out_item         # streamed output tile
    tmp_bytes = 2 * n * t * 4              # f32 intermediates (y and centered y)
    return x_bytes + w_bytes + p_bytes + o_bytes + tmp_bytes


def _pick_tile_fout(n, fin_p, fout_p, x_item, w_item, out_item, budget):
    """Largest MXU-aligned Fout tile whose (double-buffered) working set fits the budget."""
    # 256-aligned tiles keep the 2x256^2 MXUs of v6e/v7x full-width; 128 fallback (v5e,
    # or Fout_p not a multiple of 256).
    align = 256 if (fout_p % 256 == 0) else _LANE
    t = max((min(fout_p, 4096) // align) * align, align)
    while t > align and _working_set_bytes(n, fin_p, t, x_item, w_item, out_item) > budget:
        t -= align
    return t


def dense_block_kernel(x_ref, w_ref, p_ref, o_ref):
    # x: (N, Fin_p) resident across the grid; w: (Fin_p, T_FOUT) pre-transposed weight
    # tile; p: (3, T_FOUT) packed [bias; gamma; beta] (f32); o: (N, T_FOUT).
    x = x_ref[...]
    w = w_ref[...]

    # Linear: x @ W^T expressed as x @ W_t -- plain MXU matmul, f32 accumulation,
    # no in-kernel transpose of the weight tile.
    y = jnp.dot(x, w, preferred_element_type=jnp.float32)

    bias = p_ref[0:1, :].astype(jnp.float32)
    gamma = p_ref[1:2, :].astype(jnp.float32)
    beta = p_ref[2:3, :].astype(jnp.float32)

    y = y + bias
    # LeakyReLU (negative_slope = 0.01)
    y = jnp.where(y >= 0, y, LEAKY_SLOPE * y)

    # BatchNorm1d (training mode): per-feature batch mean + biased batch variance.
    # Two-pass variance (subtract the mean first) avoids E[y^2]-E[y]^2 cancellation.
    inv_n = jnp.float32(1.0 / y.shape[0])
    mean = jnp.sum(y, axis=0, keepdims=True) * inv_n
    yc = y - mean
    var = jnp.sum(yc * yc, axis=0, keepdims=True) * inv_n

    scale = gamma * jax.lax.rsqrt(var + BN_EPS)
    o_ref[...] = (yc * scale + beta).astype(o_ref.dtype)


def dense_block(x, weight, bias, gamma, beta, *, matmul_dtype=None, vmem_budget_bytes=None):
    """x: (N, Fin); weight: (Fout, Fin) as in torch.nn.Linear; bias/gamma/beta: (Fout,)."""
    n, fin = x.shape
    fout, fin_w = weight.shape
    assert fin_w == fin

    out_dtype = x.dtype
    if matmul_dtype is not None:
        # Bandwidth-bound regime (small N): halve the weight HBM stream. Off by
        # default so the default path matches torch's float32 forward numerics.
        x = x.astype(matmul_dtype)
        weight = weight.astype(matmul_dtype)

    cap = _vmem_capacity_bytes()
    budget = vmem_budget_bytes if vmem_budget_bytes is not None else (cap * 3) // 4

    x_item = x.dtype.itemsize
    w_item = weight.dtype.itemsize
    out_item = jnp.dtype(out_dtype).itemsize

    # Lane-align feature axes. Zero-padding the contraction dim is a no-op for the
    # matmul; padded output features are sliced off below.
    fin_p = _round_up(fin, _LANE)
    fout_p = _round_up(fout, _LANE)

    if 2 * n * fin_p * x_item > budget:
        # TODO(synk): N-tiled two-pass (sum / sum-of-squares accumulator) BatchNorm
        # formulation for activations too large to keep resident in VMEM (matters
        # most on v7x's 64 MiB per-TC VMEM).
        raise NotImplementedError(
            "x block does not fit resident in VMEM; N-tiled BatchNorm path not implemented")

    t_fout = _pick_tile_fout(n, fin_p, fout_p, x_item, w_item, out_item, budget)
    fout_p = _round_up(fout_p, t_fout)          # make the tile divide the padded Fout
    grid = (fout_p // t_fout,)

    # Weight / parameter preprocessing.
    # NOTE: for repeated calls with static weights, hoist this pad+transpose+pack
    # block out of the hot path and cache it -- it re-reads/writes the weight in HBM.
    w_t = jnp.pad(weight, ((0, fout_p - fout), (0, fin_p - fin))).T      # (Fin_p, Fout_p)
    params = jnp.stack([bias, gamma, beta]).astype(jnp.float32)           # (3, Fout)
    params = jnp.pad(params, ((0, 0), (0, fout_p - fout)))                # (3, Fout_p)
    if fin_p != fin:
        x = jnp.pad(x, ((0, 0), (0, fin_p - fin)))

    work = _working_set_bytes(n, fin_p, t_fout, x_item, w_item, out_item)
    vmem_limit = int(min(cap, max(32 << 20, work + (8 << 20))))

    cost = pl.CostEstimate(
        flops=2 * n * fin_p * fout_p,
        bytes_accessed=(n * fin_p * x_item + fin_p * fout_p * w_item
                        + 3 * fout_p * 4 + n * fout_p * out_item),
        transcendentals=0,
    )

    out = pl.pallas_call(
        dense_block_kernel,
        out_shape=jax.ShapeDtypeStruct((n, fout_p), out_dtype),
        grid=grid,
        in_specs=[
            pl.BlockSpec((n, fin_p), lambda j: (0, 0)),        # x: resident in VMEM
            pl.BlockSpec((fin_p, t_fout), lambda j: (0, j)),   # pre-transposed weight tile
            pl.BlockSpec((3, t_fout), lambda j: (0, j)),       # packed bias/gamma/beta
        ],
        out_specs=pl.BlockSpec((n, t_fout), lambda j: (0, j)),
        compiler_params=pltpu.CompilerParams(
            # BN stats are per-feature -> Fout tiles are fully independent.
            dimension_semantics=("parallel",),
            vmem_limit_bytes=vmem_limit,
        ),
        cost_estimate=cost,
    )(x, w_t, params)

    return out[:, :fout] if fout_p != fout else out


def reference(x, weight, bias, gamma, beta):
    y = x.astype(jnp.float32) @ weight.astype(jnp.float32).T + bias
    y = jnp.where(y >= 0, y, LEAKY_SLOPE * y)
    mean = jnp.mean(y, axis=0, keepdims=True)
    var = jnp.mean((y - mean) ** 2, axis=0, keepdims=True)
    return (y - mean) / jnp.sqrt(var + BN_EPS) * gamma + beta


if __name__ == "__main__":
    key = jax.random.PRNGKey(0)
    k_x, k_w, k_b, k_g, k_be = jax.random.split(key, 5)

    N, IN_F, OUT_F = 8, 32, 64

    x = jax.random.normal(k_x, (N, IN_F), dtype=jnp.float32)

    # Deterministic parameter init (roughly matching torch.nn.Linear's uniform scale)
    bound = 1.0 / jnp.sqrt(IN_F)
    weight = jax.random.uniform(k_w, (OUT_F, IN_F), jnp.float32, -bound, bound)
    bias = jax.random.uniform(k_b, (OUT_F,), jnp.float32, -bound, bound)
    gamma = jnp.ones((OUT_F,), jnp.float32) + 0.1 * jax.random.normal(k_g, (OUT_F,))
    beta = 0.1 * jax.random.normal(k_be, (OUT_F,))

    out = dense_block(x, weight, bias, gamma, beta)
    out = jax.block_until_ready(out)

    ref = reference(x, weight, bias, gamma, beta)
    assert out.shape == (N, OUT_F)
    assert jnp.allclose(out, ref, atol=2e-4, rtol=2e-3), "mismatch vs reference"

    print("KERNEL_OK")
</pallas_src>

<mosaic_0001>
module attributes {stable_mosaic.version = 11 : i64} {
  func.func @dense_block_kernel(%arg0: i32, %arg1: memref<8x128xf32, #tpu.memory_space<vmem>>, %arg2: memref<128x128xf32, #tpu.memory_space<vmem>>, %arg3: memref<3x128xf32, #tpu.memory_space<vmem>>, %arg4: memref<8x128xf32, #tpu.memory_space<vmem>>) attributes {dimension_semantics = [#tpu.dimension_semantics<parallel>], iteration_bounds = array<i64: 1>, scalar_prefetch = 0 : i64, scratch_operands = 0 : i64, tpu.core_type = #tpu.core_type<tc>, window_params = [{pipeline_mode = #tpu.pipeline_mode<synchronous>, transform_indices = @transform_0, window_bounds = array<i64: 8, 128>}, {transform_indices = @transform_1, window_bounds = array<i64: 128, 128>}, {transform_indices = @transform_2, window_bounds = array<i64: 3, 128>}, {transform_indices = @transform_3, window_bounds = array<i64: 8, 128>}]} {
    %c0 = arith.constant 0 : index
    %c0_0 = arith.constant 0 : index
    %0 = vector.load %arg1[%c0, %c0_0] : memref<8x128xf32, #tpu.memory_space<vmem>>, vector<8x128xf32>
    %c0_1 = arith.constant 0 : index
    %c0_2 = arith.constant 0 : index
    %1 = vector.load %arg2[%c0_1, %c0_2] : memref<128x128xf32, #tpu.memory_space<vmem>>, vector<128x128xf32>
    %cst = arith.constant dense<0.000000e+00> : vector<8x128xf32>
    %2 = tpu.matmul %0, %1, %cst {dimension_numbers = #tpu.dot_dimension_numbers<[1], [0], [0], [1], [0, 0, 1, 1], [], []>} : vector<8x128xf32>, vector<128x128xf32>, vector<8x128xf32> -> vector<8x128xf32>
    %c0_3 = arith.constant 0 : index
    %c0_4 = arith.constant 0 : index
    %3 = vector.load %arg3[%c0_3, %c0_4] : memref<3x128xf32, #tpu.memory_space<vmem>>, vector<1x128xf32>
    %c1 = arith.constant 1 : index
    %c0_5 = arith.constant 0 : index
    %4 = vector.load %arg3[%c1, %c0_5] : memref<3x128xf32, #tpu.memory_space<vmem>>, vector<1x128xf32>
    %c2 = arith.constant 2 : index
    %c0_6 = arith.constant 0 : index
    %5 = vector.load %arg3[%c2, %c0_6] : memref<3x128xf32, #tpu.memory_space<vmem>>, vector<1x128xf32>
    %6 = vector.broadcast %3 : vector<1x128xf32> to vector<8x128xf32>
    %7 = arith.addf %2, %6 : vector<8x128xf32>
    %cst_7 = arith.constant 0.000000e+00 : f32
    %8 = vector.broadcast %cst_7 : f32 to vector<8x128xf32>
    %9 = arith.cmpf oge, %7, %8 : vector<8x128xf32>
    %cst_8 = arith.constant 0.00999999977 : f32
    %10 = vector.broadcast %cst_8 : f32 to vector<8x128xf32>
    %11 = arith.mulf %10, %7 : vector<8x128xf32>
    %12 = arith.select %9, %7, %11 : vector<8x128xi1>, vector<8x128xf32>
    %cst_9 = arith.constant dense<0.000000e+00> : vector<128xf32>
    %13 = vector.multi_reduction <add>, %12, %cst_9 [0] : vector<8x128xf32> to vector<128xf32>
    %14 = vector.shape_cast %13 : vector<128xf32> to vector<1x128xf32>
    %cst_10 = arith.constant 1.250000e-01 : f32
    %15 = vector.broadcast %cst_10 : f32 to vector<1x128xf32>
    %16 = arith.mulf %14, %15 : vector<1x128xf32>
    %17 = vector.broadcast %16 : vector<1x128xf32> to vector<8x128xf32>
    %18 = arith.subf %12, %17 : vector<8x128xf32>
    %19 = arith.mulf %18, %18 : vector<8x128xf32>
    %cst_11 = arith.constant dense<0.000000e+00> : vector<128xf32>
    %20 = vector.multi_reduction <add>, %19, %cst_11 [0] : vector<8x128xf32> to vector<128xf32>
    %21 = vector.shape_cast %20 : vector<128xf32> to vector<1x128xf32>
    %cst_12 = arith.constant 1.250000e-01 : f32
    %22 = vector.broadcast %cst_12 : f32 to vector<1x128xf32>
    %23 = arith.mulf %21, %22 : vector<1x128xf32>
    %cst_13 = arith.constant 9.99999974E-6 : f32
    %24 = vector.broadcast %cst_13 : f32 to vector<1x128xf32>
    %25 = arith.addf %23, %24 : vector<1x128xf32>
    %26 = math.rsqrt %25 : vector<1x128xf32>
    %27 = arith.mulf %4, %26 : vector<1x128xf32>
    %28 = vector.broadcast %27 : vector<1x128xf32> to vector<8x128xf32>
    %29 = arith.mulf %18, %28 : vector<8x128xf32>
    %30 = vector.broadcast %5 : vector<1x128xf32> to vector<8x128xf32>
    %31 = arith.addf %29, %30 : vector<8x128xf32>
    %c0_14 = arith.constant 0 : index
    %c0_15 = arith.constant 0 : index
    %32 = vector.load %arg4[%c0_14, %c0_15] : memref<8x128xf32, #tpu.memory_space<vmem>>, vector<8x128xf32>
    tpu.vector_store %arg4[%c0_14, %c0_15], %31 {strides = array<i32>} : memref<8x128xf32, #tpu.memory_space<vmem>>, vector<8x128xf32>,
    return
  }
  func.func @transform_0(%arg0: i32) -> (i32, i32) {
    %c0_i32 = arith.constant 0 : i32
    %c0_i32_0 = arith.constant 0 : i32
    %c0_i32_1 = arith.constant 0 : i32
    return %c0_i32, %c0_i32_0 : i32, i32
  }
  func.func @transform_1(%arg0: i32) -> (i32, i32) {
    %c0_i32 = arith.constant 0 : i32
    %c0_i32_0 = arith.constant 0 : i32
    return %c0_i32, %arg0 : i32, i32
  }
  func.func @transform_2(%arg0: i32) -> (i32, i32) {
    %c0_i32 = arith.constant 0 : i32
    %c0_i32_0 = arith.constant 0 : i32
    return %c0_i32, %arg0 : i32, i32
  }
  func.func @transform_3(%arg0: i32) -> (i32, i32) {
    %c0_i32 = arith.constant 0 : i32
    %c0_i32_0 = arith.constant 0 : i32
    return %c0_i32, %arg0 : i32, i32
  }
}

</mosaic_0001>

<llo_original>
// kernel: tpu_custom_call.1
$region0: #{tpu_custom_call.1}
  #allocation0 [shape = 'u32[]', space=smem, size = 0x4, offset = 0x4, fixed_abs, tag = 'smem constant byte address 0x4 - core index']
  #allocation1 [shape = 'u32[144,128]{1,0:T(1,128)}', space=vmem, size = 0x12000, scoped, tag = 'internal scratch']
  %s0 = inlined_call_operand.hbm [shape: f32[8,128], index: 0, kind: input, shape index: {}]
  %s1 = inlined_call_operand.hbm [shape: f32[128,128], index: 1, kind: input, shape index: {}]
  %s2 = inlined_call_operand.hbm [shape: f32[3,128], index: 2, kind: input, shape index: {}]
  %s3 = inlined_call_operand.hbm [shape: f32[8,128], index: 3, kind: output, shape index: {}]
  %s4 = sld [smem:[#allocation0]]
  $region34: #{tpu_custom_call.1} parent=0
    _
  %s6 = ssub.s32 1, %s4
  %s7 = scalar_select 0, %s6, %s4
  $region1: #{tpu_custom_call.1} parent=0
    #allocation2 [shape = 'u8[4096]{0}', space=vmem, size = 0x1000, scoped, tag = 'input window, operand 0, single buffered']
    #allocation3 [shape = 's32[1]{0}', space=sflag, size = 0x4, scoped, tag = 'scoped memory for tpu_custom_call.1']
    #allocation4 [shape = 's32[1]{0}', space=sflag, size = 0x4, scoped, tag = 'scoped memory for tpu_custom_call.1']
    #allocation5 [shape = 'u8[65536]{0}', space=vmem, size = 0x10000, scoped, tag = 'input window, operand 1, single buffered']
    #allocation6 [shape = 's32[1]{0}', space=sflag, size = 0x4, scoped, tag = 'scoped memory for tpu_custom_call.1']
    #allocation7 [shape = 'u8[2048]{0}', space=vmem, size = 0x800, scoped, tag = 'input window, operand 2, single buffered']
    #allocation8 [shape = 'u8[4096]{0}', space=vmem, size = 0x1000, scoped, tag = 'output window, operand 0, single buffered']
    %8 = vsyncpa [#allocation3], 0
    %9 = vsyncpa [#allocation6], 0
    %10 = vsyncpa [#allocation4], 0
    // Predicated region
    $region2: #{tpu_custom_call.1} parent=1 // pred_check
      _
    $region3: #{tpu_custom_call.1} parent=1 // pred_check_branch
      %12 = sbr.rel (0) target = $region5
    $region4: #{tpu_custom_call.1} parent=1 // pred_region
      %s14 = ssub.s32 128, 128
      %15 = vsyncadd [#allocation3], %s14
      %s17 = sshll.u32 [#allocation2], 4
      %s18 = int_to_ptr.vmem [resolvable:$true] %s17
      %20 = dma.hbm_to_vmem [thread:$0]  %s0, 128, %s18, [#allocation3]
    $region5: #{tpu_custom_call.1} parent=1 // pred_fallthru
      _
    // Predicated region
    $region6: #{tpu_custom_call.1} parent=1 // pred_check
      _
    $region7: #{tpu_custom_call.1} parent=1 // pred_check_branch
      %22 = sbr.rel (0) target = $region9
    $region8: #{tpu_custom_call.1} parent=1 // pred_region
      %s24 = ssub.s32 2048, 2048
      %25 = vsyncadd [#allocation6], %s24
      %s26 = sshll.u32 [#allocation5], 4
      %s27 = int_to_ptr.vmem [resolvable:$true] %s26
      %32 = dma.hbm_to_vmem [thread:$0]  %s1, 2048, %s27, [#allocation6], 128, 128, 8
    $region9: #{tpu_custom_call.1} parent=1 // pred_fallthru
      _
    // Predicated region
    $region10: #{tpu_custom_call.1} parent=1 // pred_check
      _
    $region11: #{tpu_custom_call.1} parent=1 // pred_check_branch
      %34 = sbr.rel (0) target = $region13
    $region12: #{tpu_custom_call.1} parent=1 // pred_region
      %s36 = ssub.s32 64, 64
      %37 = vsyncadd [#allocation6], %s36
      %s39 = sshll.u32 [#allocation7], 4
      %s40 = int_to_ptr.vmem [resolvable:$true] %s39
      %42 = dma.hbm_to_vmem [thread:$0]  %s2, 64, %s40, [#allocation6]
    $region13: #{tpu_custom_call.1} parent=1 // pred_fallthru
      _
    // Predicated region
    $region14: #{tpu_custom_call.1} parent=1 // pred_check
      _
    $region15: #{tpu_custom_call.1} parent=1 // pred_check_branch
      %44 = sbr.rel (0) target = $region17
    $region16: #{tpu_custom_call.1} parent=1 // pred_region
      %45 = dma.done [#allocation3], 128
    $region17: #{tpu_custom_call.1} parent=1 // pred_fallthru
      _
    // Predicated region
    $region18: #{tpu_custom_call.1} parent=1 // pred_check
      _
    $region19: #{tpu_custom_call.1} parent=1 // pred_check_branch
      %47 = sbr.rel (0) target = $region21
    $region20: #{tpu_custom_call.1} parent=1 // pred_region
      %48 = dma.done [#allocation6], 2048
    $region21: #{tpu_custom_call.1} parent=1 // pred_fallthru
      _
    // Predicated region
    $region22: #{tpu_custom_call.1} parent=1 // pred_check
      _
    $region23: #{tpu_custom_call.1} parent=1 // pred_check_branch
      %50 = sbr.rel (0) target = $region25
    $region24: #{tpu_custom_call.1} parent=1 // pred_region
      %51 = dma.done [#allocation6], 64
    $region25: #{tpu_custom_call.1} parent=1 // pred_fallthru
      _
    %v52 = vld [vmem:[#allocation2] sm:$0xff]
    %v53 = vld [vmem:[#allocation5] sm:$0xff]
    %v54 = vld [vmem:[#allocation5 + $0x8] sm:$0xff]
    %v55 = vld [vmem:[#allocation5 + $0x10] sm:$0xff]
    %v56 = vld [vmem:[#allocation5 + $0x18] sm:$0xff]
    %v57 = vld [vmem:[#allocation5 + $0x20] sm:$0xff]
    %v58 = vld [vmem:[#allocation5 + $0x28] sm:$0xff]
    %v59 = vld [vmem:[#allocation5 + $0x30] sm:$0xff]
    %v60 = vld [vmem:[#allocation5 + $0x38] sm:$0xff]
    %v61 = vld [vmem:[#allocation5 + $0x40] sm:$0xff]
    %v62 = vld [vmem:[#allocation5 + $0x48] sm:$0xff]
    %v63 = vld [vmem:[#allocation5 + $0x50] sm:$0xff]
    %v64 = vld [vmem:[#allocation5 + $0x58] sm:$0xff]
    %v65 = vld [vmem:[#allocation5 + $0x60] sm:$0xff]
    %v66 = vld [vmem:[#allocation5 + $0x68] sm:$0xff]
    %v67 = vld [vmem:[#allocation5 + $0x70] sm:$0xff]
    %v68 = vld [vmem:[#allocation5 + $0x78] sm:$0xff]
    %v69 = vld [vmem:[#allocation7] sm:$0x1]
    %v70 = vld [vmem:[#allocation7 + $0x1] sm:$0x1]
    %v71 = vld [vmem:[#allocation7 + $0x2] sm:$0x1]
    %v72 = vlaneseq
    %v73 = vshrl.u32 %v72, 7
    %v74 = vsub.s32 0, %v73
    %v75 = vrot.slane %v69, %v74
    %76 = vmatprep.subr.mxu0 0.0
    %77 = vmatpush1.msra.mxu0 %v68
    %78 = vmatprep.subr.mxu0 0.0
    %79 = vmatpush1.msra.mxu0 %v67
    %80 = vmatprep.subr.mxu0 0.0
    %81 = vmatpush1.msra.mxu0 %v66
    %82 = vmatprep.subr.mxu0 0.0
    %83 = vmatpush1.msra.mxu0 %v65
    %84 = vmatprep.subr.mxu0 0.0
    %85 = vmatpush1.msra.mxu0 %v64
    %86 = vmatprep.subr.mxu0 0.0
    %87 = vmatpush1.msra.mxu0 %v63
    %88 = vmatprep.subr.mxu0 0.0
    %89 = vmatpush1.msra.mxu0 %v62
    %90 = vmatprep.subr.mxu0 0.0
    %91 = vmatpush1.msra.mxu0 %v61
    %92 = vmatprep.subr.mxu0 0.0
    %93 = vmatpush1.msra.mxu0 %v60
    %94 = vmatprep.subr.mxu0 0.0
    %95 = vmatpush1.msra.mxu0 %v59
    %96 = vmatprep.subr.mxu0 0.0
    %97 = vmatpush1.msra.mxu0 %v58
    %98 = vmatprep.subr.mxu0 0.0
    %99 = vmatpush1.msra.mxu0 %v57
    %100 = vmatprep.subr.mxu0 0.0
    %101 = vmatpush1.msra.mxu0 %v56
    %102 = vmatprep.subr.mxu0 0.0
    %103 = vmatpush1.msra.mxu0 %v55
    %104 = vmatprep.subr.mxu0 0.0
    %105 = vmatpush1.msra.mxu0 %v54
    %106 = vmatprep.subr.mxu0 0.0
    %107 = vmatpush1.msra.mxu0 %v53
    %108 = vmatprep.subr.mxu0 0.0
    %109 = vmatpush2.msra.mxu0 0.0
    %110 = vmatprep.subr.mxu0 0.0
    %111 = vmatpush2.msra.mxu0 0.0
    %112 = vmatprep.subr.mxu0 0.0
    %113 = vmatpush2.msra.mxu0 0.0
    %114 = vmatprep.subr.mxu0 0.0
    %115 = vmatpush2.msra.mxu0 0.0
    %116 = vmatprep.subr.mxu0 0.0
    %117 = vmatpush2.msra.mxu0 0.0
    %118 = vmatprep.subr.mxu0 0.0
    %119 = vmatpush2.msra.mxu0 0.0
    %120 = vmatprep.subr.mxu0 0.0
    %121 = vmatpush2.msra.mxu0 0.0
    %122 = vmatprep.subr.mxu0 0.0
    %123 = vmatpush2.msra.mxu0 0.0
    %124 = vmatprep.subr.mxu0 0.0
    %125 = vmatpush2.msra.mxu0 0.0
    %126 = vmatprep.subr.mxu0 0.0
    %127 = vmatpush2.msra.mxu0 0.0
    %128 = vmatprep.subr.mxu0 0.0
    %129 = vmatpush2.msra.mxu0 0.0
    %130 = vmatprep.subr.mxu0 0.0
    %131 = vmatpush2.msra.mxu0 0.0
    %132 = vmatprep.subr.mxu0 0.0
    %133 = vmatpush2.msra.mxu0 0.0
    %134 = vmatprep.subr.mxu0 0.0
    %135 = vmatpush2.msra.mxu0 0.0
    %136 = vmatprep.subr.mxu0 0.0
    %137 = vmatpush2.msra.mxu0 0.0
    %138 = vmatprep.subr.mxu0 0.0
    %139 = vmatpush2.msra.mxu0 0.0
    %140 = vmatprep.mubr.f32.mxu0 0.0
    %141 = vmatmul.mubr.f32.gmra.mxu0 %v52
    %v142 = vpop.f32.mrf.mxu0
    %v143 = vadd.f32 %v75, %v142
    %v144 = vpop.f32.mrf.mxu0
    %145 = vdwg.mxu0
    %vm146 = vcmp.ge.f32.partialorder %v143, 0.0
    %v147 = vmul.f32 %v143, 0.01
    %v148 = vsel %vm146, %v143, %v147
    %v149 = vrot.slane %v148, 4
    %v150 = vadd.f32 %v148, %v149
    %v151 = vrot.slane %v150, 2
    %v152 = vadd.f32 %v150, %v151
    %v153 = vrot.slane %v152, 1
    %v154 = vadd.f32 %v152, %v153
    %v155 = vmul.f32 %v154, 0.125
    %v156 = vsub.f32 %v148, %v155
    %v157 = vmul.f32 %v156, %v156
    %v158 = vrot.slane %v157, 4
    %v159 = vadd.f32 %v157, %v158
    %v160 = vrot.slane %v159, 2
    %v161 = vadd.f32 %v159, %v160
    %v162 = vrot.slane %v161, 1
    %v163 = vadd.f32 %v161, %v162
    %v164 = vmul.f32 %v163, 0.125
    %v165 = vadd.f32 %v164, 1e-05
    %v166 = vrsqrt.pop %v165
    %v167 = vmul.f32 %v70, %v166
    %v168 = vlaneseq
    %v169 = vshrl.u32 %v168, 7
    %v170 = vsub.s32 0, %v169
    %v171 = vrot.slane %v167, %v170
    %v172 = vmul.f32 %v156, %v171
    %v173 = vlaneseq
    %v174 = vshrl.u32 %v173, 7
    %v175 = vsub.s32 0, %v174
    %v176 = vrot.slane %v71, %v175
    %v177 = vadd.f32 %v172, %v176
    %178 = vst [vmem:[#allocation8] sm:$0xff] %v177
    // Predicated region
    $region26: #{tpu_custom_call.1} parent=1 // pred_check
      _
    $region27: #{tpu_custom_call.1} parent=1 // pred_check_branch
      %180 = sbr.rel (0) target = $region29
    $region28: #{tpu_custom_call.1} parent=1 // pred_region
      %s182 = ssub.s32 128, 128
      %183 = vsyncadd [#allocation4], %s182
      %s185 = sshll.u32 [#allocation8], 4
      %s186 = int_to_ptr.vmem [resolvable:$true] %s185
      %188 = dma.vmem_to_hbm [thread:$0]  %s186, 128, %s3, [#allocation4]
    $region29: #{tpu_custom_call.1} parent=1 // pred_fallthru
      _
    // Predicated region
    $region30: #{tpu_custom_call.1} parent=1 // pred_check
      _
    $region31: #{tpu_custom_call.1} parent=1 // pred_check_branch
      %190 = sbr.rel (0) target = $region33
    $region32: #{tpu_custom_call.1} parent=1 // pred_region
      %191 = dma.done [#allocation4], 128
    $region33: #{tpu_custom_call.1} parent=1 // pred_fallthru
      _
    %192 = vsyncpa [#allocation3], 1
    %193 = vsyncpa [#allocation6], 1
    %194 = vsyncpa [#allocation4], 1

</llo_original>
